<compile_context>
chip_gen: v7x
topology: tpu7x:2x2x1
jax: 0.10.0
libtpu: 0.0.40
codegen_flags: <defaults>
</compile_context>

<pallas_src>
import jax
import jax.numpy as jnp
from jax.experimental import pallas as pl
from jax.experimental.pallas import tpu as pltpu  # noqa: F401  (kept for parity)


def seq2seq_kernel(src_ref, src0g_ref, trgg_ref, tf_ref,
                   w_eh_ref, b_eh_ref, w_ec_ref, b_ec_ref,
                   w_hg_ref, b_g_ref,
                   w_combo_ref, b_combo_ref,
                   w_out_ref, b_out_ref,
                   out_ref):
    B, T = out_ref.shape
    H = w_out_ref.shape[0]

    # ---------------- off-chain (batched) work, runs once ------------------
    src_bf = src_ref[...].astype(jnp.bfloat16)                       # [B, E]

    # encoder: two batched matmuls (hidden / cell), avoids lane-slice at col H
    hid_all = jnp.tanh(
        jnp.dot(src_bf, w_eh_ref[...], preferred_element_type=jnp.float32)
        + b_eh_ref[...])                                             # [B, H] f32
    cell_all = jnp.tanh(
        jnp.dot(src_bf, w_ec_ref[...], preferred_element_type=jnp.float32)
        + b_ec_ref[...])                                             # [B, H] f32

    # hidden-state gate contribution for ALL examples in one batched matmul
    gate_h_all = (
        jnp.dot(hid_all.astype(jnp.bfloat16), w_hg_ref[...],
                preferred_element_type=jnp.float32)
        + b_g_ref[...])                                              # [B, 4H] f32

    # hoisted teacher-forcing mask (single compare over the whole batch)
    tf_b = tf_ref[...] > 0.5                                         # [B, 4H] bool
    trg_g = trgg_ref[...]                                            # [B, 4H] f32

    # the only weight living on the serial chain (bf16, 2 vregs)
    w_combo = w_combo_ref[...]                                       # [H, 4H] bf16
    b_combo = b_combo_ref[...]                                       # [1, 4H] f32

    # gate pre-activation of the first decoder input (src[0, :] @ W_xg)
    gates_x = src0g_ref[...]                                         # [1, 4H] f32

    # ---------------- serial, fully-unrolled decoder loop ------------------
    h_rows = []
    for t in range(B):
        gates = gates_x + gate_h_all[t:t + 1, :]                     # [1, 4H]

        # gate columns are [i | f | o | g]: one sigmoid (3H) + one tanh (H)
        sig = jax.nn.sigmoid(gates[:, :3 * H])                       # [1, 3H]
        g_g = jnp.tanh(gates[:, 3 * H:])                             # [1, H]
        i_g = sig[:, 0 * H:1 * H]
        f_g = sig[:, 1 * H:2 * H]
        o_g = sig[:, 2 * H:3 * H]

        c_new = f_g * cell_all[t:t + 1, :] + i_g * g_g
        h_new = o_g * jnp.tanh(c_new)                                # [1, H]
        h_rows.append(h_new)

        if t + 1 < B:
            # next input's x-gate pre-activation:
            #   teacher forced  -> trg[t]  @ W_xg   (precomputed, off-chain)
            #   otherwise       -> output  @ W_xg = h_new @ (W_out@W_xg) + b_out@W_xg
            out_gates = (
                jnp.dot(h_new.astype(jnp.bfloat16), w_combo,
                        preferred_element_type=jnp.float32)
                + b_combo)                                           # [1, 4H]
            gates_x = jnp.where(tf_b[t:t + 1, :], trg_g[t:t + 1, :], out_gates)

    # ---------------- batched output head + single dense store -------------
    h_all = jnp.concatenate(h_rows, axis=0).astype(jnp.bfloat16)     # [B, H]
    out_ref[...] = (
        jnp.dot(h_all, w_out_ref[...], preferred_element_type=jnp.float32)
        + b_out_ref[...])                                            # [B, T]


def seq2seq_forward(src, trg, tf_mask, params):
    B, E = src.shape
    _, T = trg.shape
    H = params["w_eh"].shape[1]
    assert E == T, "decoder input dim must equal trg_len (see layout comment)"

    f32, bf16 = jnp.float32, jnp.bfloat16

    # reorder gate columns from native [i, f, g, o] to [i, f, o, g] so the
    # three sigmoid gates are lane-contiguous
    def reorder_gates(w):
        i, f, g, o = jnp.split(w, 4, axis=-1)
        return jnp.concatenate([i, f, o, g], axis=-1)

    w_xg_r = reorder_gates(params["w_xg"])                           # [E, 4H]
    w_hg_r = reorder_gates(params["w_hg"])                           # [H, 4H]
    b_g_r = reorder_gates(params["b_g"])                             # [1, 4H]

    # Off-chain precomputes: per decoder step only ONE small serial matmul
    # (h_new @ W_combo) remains inside the kernel.
    src0_gates = src[0:1, :] @ w_xg_r                                # [1, 4H]
    trg_gates = trg @ w_xg_r                                         # [B, 4H]
    w_combo = params["w_out"] @ w_xg_r                               # [H, 4H]
    b_combo = params["b_out"] @ w_xg_r                               # [1, 4H]
    tf_full = jnp.broadcast_to(tf_mask.astype(f32), (B, 4 * H))      # [B, 4H]

    args = (
        src.astype(f32), src0_gates.astype(f32), trg_gates.astype(f32), tf_full,
        params["w_eh"].astype(bf16), params["b_eh"].astype(f32),
        params["w_ec"].astype(bf16), params["b_ec"].astype(f32),
        w_hg_r.astype(bf16), b_g_r.astype(f32),
        w_combo.astype(bf16), b_combo.astype(f32),
        params["w_out"].astype(bf16), params["b_out"].astype(f32),
    )

    # No grid: the whole (~20 KB) working set lives in VMEM; a grid would only
    # add per-step pipeline bookkeeping to a latency-bound few-microsecond kernel.
    return pl.pallas_call(
        seq2seq_kernel,
        out_shape=jax.ShapeDtypeStruct((B, T), jnp.float32),
    )(*args)


def seq2seq_reference(src, trg, tf_mask, params):
    """Pure-JAX f32 reference mirroring the PyTorch forward (for validation)."""
    B, E = src.shape
    _, T = trg.shape
    H = params["w_eh"].shape[1]
    hid = jnp.tanh(src @ params["w_eh"] + params["b_eh"])
    cell = jnp.tanh(src @ params["w_ec"] + params["b_ec"])
    inp = src[0:1, :]
    outs = []
    for t in range(B):
        h = hid[t:t + 1, :]
        c = cell[t:t + 1, :]
        gates = inp @ params["w_xg"] + h @ params["w_hg"] + params["b_g"]
        i_g, f_g, g_g, o_g = jnp.split(gates, 4, axis=-1)
        i_g, f_g, o_g = jax.nn.sigmoid(i_g), jax.nn.sigmoid(f_g), jax.nn.sigmoid(o_g)
        g_g = jnp.tanh(g_g)
        c = f_g * c + i_g * g_g
        h = o_g * jnp.tanh(c)
        out = h @ params["w_out"] + params["b_out"]
        outs.append(out)
        inp = jnp.where(tf_mask[t:t + 1, :] > 0.5, trg[t:t + 1, :], out)
    return jnp.concatenate(outs, axis=0)


def make_params(key, E, H, T):
    ks = jax.random.split(key, 8)
    s = 0.1
    return {
        "w_eh": s * jax.random.normal(ks[0], (E, H), jnp.float32),
        "b_eh": s * jax.random.normal(ks[1], (1, H), jnp.float32),
        "w_ec": s * jax.random.normal(ks[2], (E, H), jnp.float32),
        "b_ec": s * jax.random.normal(ks[3], (1, H), jnp.float32),
        "w_xg": s * jax.random.normal(ks[4], (E, 4 * H), jnp.float32),
        "w_hg": s * jax.random.normal(ks[5], (H, 4 * H), jnp.float32),
        "b_g":  jnp.zeros((1, 4 * H), jnp.float32),
        "w_out": s * jax.random.normal(ks[6], (H, T), jnp.float32),
        "b_out": s * jax.random.normal(ks[7], (1, T), jnp.float32),
    }


if __name__ == "__main__":
    B, T, H = 8, 16, 32          # batch, trg_len (== decoder input dim E), hidden
    E = T

    root = jax.random.PRNGKey(0)
    k_src, k_trg, k_tf, k_par = jax.random.split(root, 4)

    src = jax.random.normal(k_src, (B, E), jnp.float32)
    trg = jax.random.normal(k_trg, (B, T), jnp.float32)
    # deterministic stand-in for random.random() < teacher_forcing_ratio (0.5)
    tf_mask = (jax.random.uniform(k_tf, (B, 1)) < 0.5).astype(jnp.float32)
    params = make_params(k_par, E, H, T)

    outputs = seq2seq_forward(src, trg, tf_mask, params)
    jax.block_until_ready(outputs)
    assert outputs.shape == (B, T) and outputs.dtype == jnp.float32

    # validate against the pure-JAX f32 reference (bf16 MXU inputs + the
    # W_out@W_xg reassociation introduce small rounding differences)
    ref = seq2seq_reference(src, trg, tf_mask, params)
    max_err = float(jnp.max(jnp.abs(outputs - ref)))
    assert max_err < 5e-2, f"kernel/reference mismatch, max abs err = {max_err}"

    print("KERNEL_OK")
</pallas_src>

<mosaic_0001>
module attributes {stable_mosaic.version = 11 : i64} {
  func.func @seq2seq_kernel(%arg0: memref<8x16xf32, #tpu.memory_space<vmem>>, %arg1: memref<1x128xf32, #tpu.memory_space<vmem>>, %arg2: memref<8x128xf32, #tpu.memory_space<vmem>>, %arg3: memref<8x128xf32, #tpu.memory_space<vmem>>, %arg4: memref<16x32xbf16, #tpu.memory_space<vmem>>, %arg5: memref<1x32xf32, #tpu.memory_space<vmem>>, %arg6: memref<16x32xbf16, #tpu.memory_space<vmem>>, %arg7: memref<1x32xf32, #tpu.memory_space<vmem>>, %arg8: memref<32x128xbf16, #tpu.memory_space<vmem>>, %arg9: memref<1x128xf32, #tpu.memory_space<vmem>>, %arg10: memref<32x128xbf16, #tpu.memory_space<vmem>>, %arg11: memref<1x128xf32, #tpu.memory_space<vmem>>, %arg12: memref<32x16xbf16, #tpu.memory_space<vmem>>, %arg13: memref<1x16xf32, #tpu.memory_space<vmem>>, %arg14: memref<8x16xf32, #tpu.memory_space<vmem>>) attributes {dimension_semantics = [], scalar_prefetch = 0 : i64, scratch_operands = 0 : i64, tpu.core_type = #tpu.core_type<tc>} {
    %c0 = arith.constant 0 : index
    %c0_0 = arith.constant 0 : index
    %0 = vector.load %arg0[%c0, %c0_0] : memref<8x16xf32, #tpu.memory_space<vmem>>, vector<8x16xf32>
    %1 = arith.truncf %0 : vector<8x16xf32> to vector<8x16xbf16>
    %c0_1 = arith.constant 0 : index
    %c0_2 = arith.constant 0 : index
    %2 = vector.load %arg4[%c0_1, %c0_2] : memref<16x32xbf16, #tpu.memory_space<vmem>>, vector<16x32xbf16>
    %cst = arith.constant dense<0.000000e+00> : vector<8x32xf32>
    %3 = tpu.matmul %1, %2, %cst {dimension_numbers = #tpu.dot_dimension_numbers<[1], [0], [0], [1], [0, 0, 1, 1], [], []>} : vector<8x16xbf16>, vector<16x32xbf16>, vector<8x32xf32> -> vector<8x32xf32>
    %c0_3 = arith.constant 0 : index
    %c0_4 = arith.constant 0 : index
    %4 = vector.load %arg5[%c0_3, %c0_4] : memref<1x32xf32, #tpu.memory_space<vmem>>, vector<1x32xf32>
    %5 = vector.broadcast %4 : vector<1x32xf32> to vector<8x32xf32>
    %6 = arith.addf %3, %5 : vector<8x32xf32>
    %7 = math.tanh %6 : vector<8x32xf32>
    %c0_5 = arith.constant 0 : index
    %c0_6 = arith.constant 0 : index
    %8 = vector.load %arg6[%c0_5, %c0_6] : memref<16x32xbf16, #tpu.memory_space<vmem>>, vector<16x32xbf16>
    %cst_7 = arith.constant dense<0.000000e+00> : vector<8x32xf32>
    %9 = tpu.matmul %1, %8, %cst_7 {dimension_numbers = #tpu.dot_dimension_numbers<[1], [0], [0], [1], [0, 0, 1, 1], [], []>} : vector<8x16xbf16>, vector<16x32xbf16>, vector<8x32xf32> -> vector<8x32xf32>
    %c0_8 = arith.constant 0 : index
    %c0_9 = arith.constant 0 : index
    %10 = vector.load %arg7[%c0_8, %c0_9] : memref<1x32xf32, #tpu.memory_space<vmem>>, vector<1x32xf32>
    %11 = vector.broadcast %10 : vector<1x32xf32> to vector<8x32xf32>
    %12 = arith.addf %9, %11 : vector<8x32xf32>
    %13 = math.tanh %12 : vector<8x32xf32>
    %14 = arith.truncf %7 : vector<8x32xf32> to vector<8x32xbf16>
    %c0_10 = arith.constant 0 : index
    %c0_11 = arith.constant 0 : index
    %15 = vector.load %arg8[%c0_10, %c0_11] : memref<32x128xbf16, #tpu.memory_space<vmem>>, vector<32x128xbf16>
    %cst_12 = arith.constant dense<0.000000e+00> : vector<8x128xf32>
    %16 = tpu.matmul %14, %15, %cst_12 {dimension_numbers = #tpu.dot_dimension_numbers<[1], [0], [0], [1], [0, 0, 1, 1], [], []>} : vector<8x32xbf16>, vector<32x128xbf16>, vector<8x128xf32> -> vector<8x128xf32>
    %c0_13 = arith.constant 0 : index
    %c0_14 = arith.constant 0 : index
    %17 = vector.load %arg9[%c0_13, %c0_14] : memref<1x128xf32, #tpu.memory_space<vmem>>, vector<1x128xf32>
    %18 = vector.broadcast %17 : vector<1x128xf32> to vector<8x128xf32>
    %19 = arith.addf %16, %18 : vector<8x128xf32>
    %c0_15 = arith.constant 0 : index
    %c0_16 = arith.constant 0 : index
    %20 = vector.load %arg3[%c0_15, %c0_16] : memref<8x128xf32, #tpu.memory_space<vmem>>, vector<8x128xf32>
    %cst_17 = arith.constant 5.000000e-01 : f32
    %21 = vector.broadcast %cst_17 : f32 to vector<8x128xf32>
    %22 = arith.cmpf ogt, %20, %21 : vector<8x128xf32>
    %c0_18 = arith.constant 0 : index
    %c0_19 = arith.constant 0 : index
    %23 = vector.load %arg2[%c0_18, %c0_19] : memref<8x128xf32, #tpu.memory_space<vmem>>, vector<8x128xf32>
    %c0_20 = arith.constant 0 : index
    %c0_21 = arith.constant 0 : index
    %24 = vector.load %arg10[%c0_20, %c0_21] : memref<32x128xbf16, #tpu.memory_space<vmem>>, vector<32x128xbf16>
    %c0_22 = arith.constant 0 : index
    %c0_23 = arith.constant 0 : index
    %25 = vector.load %arg11[%c0_22, %c0_23] : memref<1x128xf32, #tpu.memory_space<vmem>>, vector<1x128xf32>
    %c0_24 = arith.constant 0 : index
    %c0_25 = arith.constant 0 : index
    %26 = vector.load %arg1[%c0_24, %c0_25] : memref<1x128xf32, #tpu.memory_space<vmem>>, vector<1x128xf32>
    %27 = vector.extract_strided_slice %19 {offsets = [0, 0], sizes = [1, 128], strides = [1, 1]} : vector<8x128xf32> to vector<1x128xf32>
    %28 = arith.addf %26, %27 : vector<1x128xf32>
    %29 = vector.extract_strided_slice %28 {offsets = [0, 0], sizes = [1, 96], strides = [1, 1]} : vector<1x128xf32> to vector<1x96xf32>
    %30 = arith.negf %29 : vector<1x96xf32>
    %31 = math.exp %30 : vector<1x96xf32>
    %cst_26 = arith.constant 1.000000e+00 : f32
    %32 = vector.broadcast %cst_26 : f32 to vector<1x96xf32>
    %33 = arith.addf %32, %31 : vector<1x96xf32>
    %34 = arith.divf %32, %33 : vector<1x96xf32>
    %35 = vector.extract_strided_slice %28 {offsets = [0, 96], sizes = [1, 32], strides = [1, 1]} : vector<1x128xf32> to vector<1x32xf32>
    %36 = math.tanh %35 : vector<1x32xf32>
    %37 = vector.extract_strided_slice %34 {offsets = [0, 0], sizes = [1, 32], strides = [1, 1]} : vector<1x96xf32> to vector<1x32xf32>
    %38 = vector.extract_strided_slice %34 {offsets = [0, 32], sizes = [1, 32], strides = [1, 1]} : vector<1x96xf32> to vector<1x32xf32>
    %39 = vector.extract_strided_slice %34 {offsets = [0, 64], sizes = [1, 32], strides = [1, 1]} : vector<1x96xf32> to vector<1x32xf32>
    %40 = vector.extract_strided_slice %13 {offsets = [0, 0], sizes = [1, 32], strides = [1, 1]} : vector<8x32xf32> to vector<1x32xf32>
    %41 = arith.mulf %38, %40 : vector<1x32xf32>
    %42 = arith.mulf %37, %36 : vector<1x32xf32>
    %43 = arith.addf %41, %42 : vector<1x32xf32>
    %44 = math.tanh %43 : vector<1x32xf32>
    %45 = arith.mulf %39, %44 : vector<1x32xf32>
    %46 = arith.truncf %45 : vector<1x32xf32> to vector<1x32xbf16>
    %cst_27 = arith.constant dense<0.000000e+00> : vector<1x128xf32>
    %47 = tpu.matmul %46, %24, %cst_27 {dimension_numbers = #tpu.dot_dimension_numbers<[1], [0], [0], [1], [0, 0, 1, 1], [], []>} : vector<1x32xbf16>, vector<32x128xbf16>, vector<1x128xf32> -> vector<1x128xf32>
    %48 = arith.addf %47, %25 : vector<1x128xf32>
    %49 = vector.extract_strided_slice %22 {offsets = [0, 0], sizes = [1, 128], strides = [1, 1]} : vector<8x128xi1> to vector<1x128xi1>
    %50 = vector.extract_strided_slice %23 {offsets = [0, 0], sizes = [1, 128], strides = [1, 1]} : vector<8x128xf32> to vector<1x128xf32>
    %51 = arith.select %49, %50, %48 : vector<1x128xi1>, vector<1x128xf32>
    %52 = vector.extract_strided_slice %19 {offsets = [1, 0], sizes = [1, 128], strides = [1, 1]} : vector<8x128xf32> to vector<1x128xf32>
    %53 = arith.addf %51, %52 : vector<1x128xf32>
    %54 = vector.extract_strided_slice %53 {offsets = [0, 0], sizes = [1, 96], strides = [1, 1]} : vector<1x128xf32> to vector<1x96xf32>
    %55 = arith.negf %54 : vector<1x96xf32>
    %56 = math.exp %55 : vector<1x96xf32>
    %cst_28 = arith.constant 1.000000e+00 : f32
    %57 = vector.broadcast %cst_28 : f32 to vector<1x96xf32>
    %58 = arith.addf %57, %56 : vector<1x96xf32>
    %59 = arith.divf %57, %58 : vector<1x96xf32>
    %60 = vector.extract_strided_slice %53 {offsets = [0, 96], sizes = [1, 32], strides = [1, 1]} : vector<1x128xf32> to vector<1x32xf32>
    %61 = math.tanh %60 : vector<1x32xf32>
    %62 = vector.extract_strided_slice %59 {offsets = [0, 0], sizes = [1, 32], strides = [1, 1]} : vector<1x96xf32> to vector<1x32xf32>
    %63 = vector.extract_strided_slice %59 {offsets = [0, 32], sizes = [1, 32], strides = [1, 1]} : vector<1x96xf32> to vector<1x32xf32>
    %64 = vector.extract_strided_slice %59 {offsets = [0, 64], sizes = [1, 32], strides = [1, 1]} : vector<1x96xf32> to vector<1x32xf32>
    %65 = vector.extract_strided_slice %13 {offsets = [1, 0], sizes = [1, 32], strides = [1, 1]} : vector<8x32xf32> to vector<1x32xf32>
    %66 = arith.mulf %63, %65 : vector<1x32xf32>
    %67 = arith.mulf %62, %61 : vector<1x32xf32>
    %68 = arith.addf %66, %67 : vector<1x32xf32>
    %69 = math.tanh %68 : vector<1x32xf32>
    %70 = arith.mulf %64, %69 : vector<1x32xf32>
    %71 = arith.truncf %70 : vector<1x32xf32> to vector<1x32xbf16>
    %cst_29 = arith.constant dense<0.000000e+00> : vector<1x128xf32>
    %72 = tpu.matmul %71, %24, %cst_29 {dimension_numbers = #tpu.dot_dimension_numbers<[1], [0], [0], [1], [0, 0, 1, 1], [], []>} : vector<1x32xbf16>, vector<32x128xbf16>, vector<1x128xf32> -> vector<1x128xf32>
    %73 = arith.addf %72, %25 : vector<1x128xf32>
    %74 = vector.extract_strided_slice %22 {offsets = [1, 0], sizes = [1, 128], strides = [1, 1]} : vector<8x128xi1> to vector<1x128xi1>
    %75 = vector.extract_strided_slice %23 {offsets = [1, 0], sizes = [1, 128], strides = [1, 1]} : vector<8x128xf32> to vector<1x128xf32>
    %76 = arith.select %74, %75, %73 : vector<1x128xi1>, vector<1x128xf32>
    %77 = vector.extract_strided_slice %19 {offsets = [2, 0], sizes = [1, 128], strides = [1, 1]} : vector<8x128xf32> to vector<1x128xf32>
    %78 = arith.addf %76, %77 : vector<1x128xf32>
    %79 = vector.extract_strided_slice %78 {offsets = [0, 0], sizes = [1, 96], strides = [1, 1]} : vector<1x128xf32> to vector<1x96xf32>
    %80 = arith.negf %79 : vector<1x96xf32>
    %81 = math.exp %80 : vector<1x96xf32>
    %cst_30 = arith.constant 1.000000e+00 : f32
    %82 = vector.broadcast %cst_30 : f32 to vector<1x96xf32>
    %83 = arith.addf %82, %81 : vector<1x96xf32>
    %84 = arith.divf %82, %83 : vector<1x96xf32>
    %85 = vector.extract_strided_slice %78 {offsets = [0, 96], sizes = [1, 32], strides = [1, 1]} : vector<1x128xf32> to vector<1x32xf32>
    %86 = math.tanh %85 : vector<1x32xf32>
    %87 = vector.extract_strided_slice %84 {offsets = [0, 0], sizes = [1, 32], strides = [1, 1]} : vector<1x96xf32> to vector<1x32xf32>
    %88 = vector.extract_strided_slice %84 {offsets = [0, 32], sizes = [1, 32], strides = [1, 1]} : vector<1x96xf32> to vector<1x32xf32>
    %89 = vector.extract_strided_slice %84 {offsets = [0, 64], sizes = [1, 32], strides = [1, 1]} : vector<1x96xf32> to vector<1x32xf32>
    %90 = vector.extract_strided_slice %13 {offsets = [2, 0], sizes = [1, 32], strides = [1, 1]} : vector<8x32xf32> to vector<1x32xf32>
    %91 = arith.mulf %88, %90 : vector<1x32xf32>
    %92 = arith.mulf %87, %86 : vector<1x32xf32>
    %93 = arith.addf %91, %92 : vector<1x32xf32>
    %94 = math.tanh %93 : vector<1x32xf32>
    %95 = arith.mulf %89, %94 : vector<1x32xf32>
    %96 = arith.truncf %95 : vector<1x32xf32> to vector<1x32xbf16>
    %cst_31 = arith.constant dense<0.000000e+00> : vector<1x128xf32>
    %97 = tpu.matmul %96, %24, %cst_31 {dimension_numbers = #tpu.dot_dimension_numbers<[1], [0], [0], [1], [0, 0, 1, 1], [], []>} : vector<1x32xbf16>, vector<32x128xbf16>, vector<1x128xf32> -> vector<1x128xf32>
    %98 = arith.addf %97, %25 : vector<1x128xf32>
    %99 = vector.extract_strided_slice %22 {offsets = [2, 0], sizes = [1, 128], strides = [1, 1]} : vector<8x128xi1> to vector<1x128xi1>
    %100 = vector.extract_strided_slice %23 {offsets = [2, 0], sizes = [1, 128], strides = [1, 1]} : vector<8x128xf32> to vector<1x128xf32>
    %101 = arith.select %99, %100, %98 : vector<1x128xi1>, vector<1x128xf32>
    %102 = vector.extract_strided_slice %19 {offsets = [3, 0], sizes = [1, 128], strides = [1, 1]} : vector<8x128xf32> to vector<1x128xf32>
    %103 = arith.addf %101, %102 : vector<1x128xf32>
    %104 = vector.extract_strided_slice %103 {offsets = [0, 0], sizes = [1, 96], strides = [1, 1]} : vector<1x128xf32> to vector<1x96xf32>
    %105 = arith.negf %104 : vector<1x96xf32>
    %106 = math.exp %105 : vector<1x96xf32>
    %cst_32 = arith.constant 1.000000e+00 : f32
    %107 = vector.broadcast %cst_32 : f32 to vector<1x96xf32>
    %108 = arith.addf %107, %106 : vector<1x96xf32>
    %109 = arith.divf %107, %108 : vector<1x96xf32>
    %110 = vector.extract_strided_slice %103 {offsets = [0, 96], sizes = [1, 32], strides = [1, 1]} : vector<1x128xf32> to vector<1x32xf32>
    %111 = math.tanh %110 : vector<1x32xf32>
    %112 = vector.extract_strided_slice %109 {offsets = [0, 0], sizes = [1, 32], strides = [1, 1]} : vector<1x96xf32> to vector<1x32xf32>
    %113 = vector.extract_strided_slice %109 {offsets = [0, 32], sizes = [1, 32], strides = [1, 1]} : vector<1x96xf32> to vector<1x32xf32>
    %114 = vector.extract_strided_slice %109 {offsets = [0, 64], sizes = [1, 32], strides = [1, 1]} : vector<1x96xf32> to vector<1x32xf32>
    %115 = vector.extract_strided_slice %13 {offsets = [3, 0], sizes = [1, 32], strides = [1, 1]} : vector<8x32xf32> to vector<1x32xf32>
    %116 = arith.mulf %113, %115 : vector<1x32xf32>
    %117 = arith.mulf %112, %111 : vector<1x32xf32>
    %118 = arith.addf %116, %117 : vector<1x32xf32>
    %119 = math.tanh %118 : vector<1x32xf32>
    %120 = arith.mulf %114, %119 : vector<1x32xf32>
    %121 = arith.truncf %120 : vector<1x32xf32> to vector<1x32xbf16>
    %cst_33 = arith.constant dense<0.000000e+00> : vector<1x128xf32>
    %122 = tpu.matmul %121, %24, %cst_33 {dimension_numbers = #tpu.dot_dimension_numbers<[1], [0], [0], [1], [0, 0, 1, 1], [], []>} : vector<1x32xbf16>, vector<32x128xbf16>, vector<1x128xf32> -> vector<1x128xf32>
    %123 = arith.addf %122, %25 : vector<1x128xf32>
    %124 = vector.extract_strided_slice %22 {offsets = [3, 0], sizes = [1, 128], strides = [1, 1]} : vector<8x128xi1> to vector<1x128xi1>
    %125 = vector.extract_strided_slice %23 {offsets = [3, 0], sizes = [1, 128], strides = [1, 1]} : vector<8x128xf32> to vector<1x128xf32>
    %126 = arith.select %124, %125, %123 : vector<1x128xi1>, vector<1x128xf32>
    %127 = vector.extract_strided_slice %19 {offsets = [4, 0], sizes = [1, 128], strides = [1, 1]} : vector<8x128xf32> to vector<1x128xf32>
    %128 = arith.addf %126, %127 : vector<1x128xf32>
    %129 = vector.extract_strided_slice %128 {offsets = [0, 0], sizes = [1, 96], strides = [1, 1]} : vector<1x128xf32> to vector<1x96xf32>
    %130 = arith.negf %129 : vector<1x96xf32>
    %131 = math.exp %130 : vector<1x96xf32>
    %cst_34 = arith.constant 1.000000e+00 : f32
    %132 = vector.broadcast %cst_34 : f32 to vector<1x96xf32>
    %133 = arith.addf %132, %131 : vector<1x96xf32>
    %134 = arith.divf %132, %133 : vector<1x96xf32>
    %135 = vector.extract_strided_slice %128 {offsets = [0, 96], sizes = [1, 32], strides = [1, 1]} : vector<1x128xf32> to vector<1x32xf32>
    %136 = math.tanh %135 : vector<1x32xf32>
    %137 = vector.extract_strided_slice %134 {offsets = [0, 0], sizes = [1, 32], strides = [1, 1]} : vector<1x96xf32> to vector<1x32xf32>
    %138 = vector.extract_strided_slice %134 {offsets = [0, 32], sizes = [1, 32], strides = [1, 1]} : vector<1x96xf32> to vector<1x32xf32>
    %139 = vector.extract_strided_slice %134 {offsets = [0, 64], sizes = [1, 32], strides = [1, 1]} : vector<1x96xf32> to vector<1x32xf32>
    %140 = vector.extract_strided_slice %13 {offsets = [4, 0], sizes = [1, 32], strides = [1, 1]} : vector<8x32xf32> to vector<1x32xf32>
    %141 = arith.mulf %138, %140 : vector<1x32xf32>
    %142 = arith.mulf %137, %136 : vector<1x32xf32>
    %143 = arith.addf %141, %142 : vector<1x32xf32>
    %144 = math.tanh %143 : vector<1x32xf32>
    %145 = arith.mulf %139, %144 : vector<1x32xf32>
    %146 = arith.truncf %145 : vector<1x32xf32> to vector<1x32xbf16>
    %cst_35 = arith.constant dense<0.000000e+00> : vector<1x128xf32>
    %147 = tpu.matmul %146, %24, %cst_35 {dimension_numbers = #tpu.dot_dimension_numbers<[1], [0], [0], [1], [0, 0, 1, 1], [], []>} : vector<1x32xbf16>, vector<32x128xbf16>, vector<1x128xf32> -> vector<1x128xf32>
    %148 = arith.addf %147, %25 : vector<1x128xf32>
    %149 = vector.extract_strided_slice %22 {offsets = [4, 0], sizes = [1, 128], strides = [1, 1]} : vector<8x128xi1> to vector<1x128xi1>
    %150 = vector.extract_strided_slice %23 {offsets = [4, 0], sizes = [1, 128], strides = [1, 1]} : vector<8x128xf32> to vector<1x128xf32>
    %151 = arith.select %149, %150, %148 : vector<1x128xi1>, vector<1x128xf32>
    %152 = vector.extract_strided_slice %19 {offsets = [5, 0], sizes = [1, 128], strides = [1, 1]} : vector<8x128xf32> to vector<1x128xf32>
    %153 = arith.addf %151, %152 : vector<1x128xf32>
    %154 = vector.extract_strided_slice %153 {offsets = [0, 0], sizes = [1, 96], strides = [1, 1]} : vector<1x128xf32> to vector<1x96xf32>
    %155 = arith.negf %154 : vector<1x96xf32>
    %156 = math.exp %155 : vector<1x96xf32>
    %cst_36 = arith.constant 1.000000e+00 : f32
    %157 = vector.broadcast %cst_36 : f32 to vector<1x96xf32>
    %158 = arith.addf %157, %156 : vector<1x96xf32>
    %159 = arith.divf %157, %158 : vector<1x96xf32>
    %160 = vector.extract_strided_slice %153 {offsets = [0, 96], sizes = [1, 32], strides = [1, 1]} : vector<1x128xf32> to vector<1x32xf32>
    %161 = math.tanh %160 : vector<1x32xf32>
    %162 = vector.extract_strided_slice %159 {offsets = [0, 0], sizes = [1, 32], strides = [1, 1]} : vector<1x96xf32> to vector<1x32xf32>
    %163 = vector.extract_strided_slice %159 {offsets = [0, 32], sizes = [1, 32], strides = [1, 1]} : vector<1x96xf32> to vector<1x32xf32>
    %164 = vector.extract_strided_slice %159 {offsets = [0, 64], sizes = [1, 32], strides = [1, 1]} : vector<1x96xf32> to vector<1x32xf32>
    %165 = vector.extract_strided_slice %13 {offsets = [5, 0], sizes = [1, 32], strides = [1, 1]} : vector<8x32xf32> to vector<1x32xf32>
    %166 = arith.mulf %163, %165 : vector<1x32xf32>
    %167 = arith.mulf %162, %161 : vector<1x32xf32>
    %168 = arith.addf %166, %167 : vector<1x32xf32>
    %169 = math.tanh %168 : vector<1x32xf32>
    %170 = arith.mulf %164, %169 : vector<1x32xf32>
    %171 = arith.truncf %170 : vector<1x32xf32> to vector<1x32xbf16>
    %cst_37 = arith.constant dense<0.000000e+00> : vector<1x128xf32>
    %172 = tpu.matmul %171, %24, %cst_37 {dimension_numbers = #tpu.dot_dimension_numbers<[1], [0], [0], [1], [0, 0, 1, 1], [], []>} : vector<1x32xbf16>, vector<32x128xbf16>, vector<1x128xf32> -> vector<1x128xf32>
    %173 = arith.addf %172, %25 : vector<1x128xf32>
    %174 = vector.extract_strided_slice %22 {offsets = [5, 0], sizes = [1, 128], strides = [1, 1]} : vector<8x128xi1> to vector<1x128xi1>
    %175 = vector.extract_strided_slice %23 {offsets = [5, 0], sizes = [1, 128], strides = [1, 1]} : vector<8x128xf32> to vector<1x128xf32>
    %176 = arith.select %174, %175, %173 : vector<1x128xi1>, vector<1x128xf32>
    %177 = vector.extract_strided_slice %19 {offsets = [6, 0], sizes = [1, 128], strides = [1, 1]} : vector<8x128xf32> to vector<1x128xf32>
    %178 = arith.addf %176, %177 : vector<1x128xf32>
    %179 = vector.extract_strided_slice %178 {offsets = [0, 0], sizes = [1, 96], strides = [1, 1]} : vector<1x128xf32> to vector<1x96xf32>
    %180 = arith.negf %179 : vector<1x96xf32>
    %181 = math.exp %180 : vector<1x96xf32>
    %cst_38 = arith.constant 1.000000e+00 : f32
    %182 = vector.broadcast %cst_38 : f32 to vector<1x96xf32>
    %183 = arith.addf %182, %181 : vector<1x96xf32>
    %184 = arith.divf %182, %183 : vector<1x96xf32>
    %185 = vector.extract_strided_slice %178 {offsets = [0, 96], sizes = [1, 32], strides = [1, 1]} : vector<1x128xf32> to vector<1x32xf32>
    %186 = math.tanh %185 : vector<1x32xf32>
    %187 = vector.extract_strided_slice %184 {offsets = [0, 0], sizes = [1, 32], strides = [1, 1]} : vector<1x96xf32> to vector<1x32xf32>
    %188 = vector.extract_strided_slice %184 {offsets = [0, 32], sizes = [1, 32], strides = [1, 1]} : vector<1x96xf32> to vector<1x32xf32>
    %189 = vector.extract_strided_slice %184 {offsets = [0, 64], sizes = [1, 32], strides = [1, 1]} : vector<1x96xf32> to vector<1x32xf32>
    %190 = vector.extract_strided_slice %13 {offsets = [6, 0], sizes = [1, 32], strides = [1, 1]} : vector<8x32xf32> to vector<1x32xf32>
    %191 = arith.mulf %188, %190 : vector<1x32xf32>
    %192 = arith.mulf %187, %186 : vector<1x32xf32>
    %193 = arith.addf %191, %192 : vector<1x32xf32>
    %194 = math.tanh %193 : vector<1x32xf32>
    %195 = arith.mulf %189, %194 : vector<1x32xf32>
    %196 = arith.truncf %195 : vector<1x32xf32> to vector<1x32xbf16>
    %cst_39 = arith.constant dense<0.000000e+00> : vector<1x128xf32>
    %197 = tpu.matmul %196, %24, %cst_39 {dimension_numbers = #tpu.dot_dimension_numbers<[1], [0], [0], [1], [0, 0, 1, 1], [], []>} : vector<1x32xbf16>, vector<32x128xbf16>, vector<1x128xf32> -> vector<1x128xf32>
    %198 = arith.addf %197, %25 : vector<1x128xf32>
    %199 = vector.extract_strided_slice %22 {offsets = [6, 0], sizes = [1, 128], strides = [1, 1]} : vector<8x128xi1> to vector<1x128xi1>
    %200 = vector.extract_strided_slice %23 {offsets = [6, 0], sizes = [1, 128], strides = [1, 1]} : vector<8x128xf32> to vector<1x128xf32>
    %201 = arith.select %199, %200, %198 : vector<1x128xi1>, vector<1x128xf32>
    %202 = vector.extract_strided_slice %19 {offsets = [7, 0], sizes = [1, 128], strides = [1, 1]} : vector<8x128xf32> to vector<1x128xf32>
    %203 = arith.addf %201, %202 : vector<1x128xf32>
    %204 = vector.extract_strided_slice %203 {offsets = [0, 0], sizes = [1, 96], strides = [1, 1]} : vector<1x128xf32> to vector<1x96xf32>
    %205 = arith.negf %204 : vector<1x96xf32>
    %206 = math.exp %205 : vector<1x96xf32>
    %cst_40 = arith.constant 1.000000e+00 : f32
    %207 = vector.broadcast %cst_40 : f32 to vector<1x96xf32>
    %208 = arith.addf %207, %206 : vector<1x96xf32>
    %209 = arith.divf %207, %208 : vector<1x96xf32>
    %210 = vector.extract_strided_slice %203 {offsets = [0, 96], sizes = [1, 32], strides = [1, 1]} : vector<1x128xf32> to vector<1x32xf32>
    %211 = math.tanh %210 : vector<1x32xf32>
    %212 = vector.extract_strided_slice %209 {offsets = [0, 0], sizes = [1, 32], strides = [1, 1]} : vector<1x96xf32> to vector<1x32xf32>
    %213 = vector.extract_strided_slice %209 {offsets = [0, 32], sizes = [1, 32], strides = [1, 1]} : vector<1x96xf32> to vector<1x32xf32>
    %214 = vector.extract_strided_slice %209 {offsets = [0, 64], sizes = [1, 32], strides = [1, 1]} : vector<1x96xf32> to vector<1x32xf32>
    %215 = vector.extract_strided_slice %13 {offsets = [7, 0], sizes = [1, 32], strides = [1, 1]} : vector<8x32xf32> to vector<1x32xf32>
    %216 = arith.mulf %213, %215 : vector<1x32xf32>
    %217 = arith.mulf %212, %211 : vector<1x32xf32>
    %218 = arith.addf %216, %217 : vector<1x32xf32>
    %219 = math.tanh %218 : vector<1x32xf32>
    %220 = arith.mulf %214, %219 : vector<1x32xf32>
    %221 = tpu.concatenate %45, %70, %95, %120, %145, %170, %195, %220 in 0 : vector<1x32xf32>, vector<1x32xf32>, vector<1x32xf32>, vector<1x32xf32>, vector<1x32xf32>, vector<1x32xf32>, vector<1x32xf32>, vector<1x32xf32> -> vector<8x32xf32>
    %222 = arith.truncf %221 : vector<8x32xf32> to vector<8x32xbf16>
    %c0_41 = arith.constant 0 : index
    %c0_42 = arith.constant 0 : index
    %223 = vector.load %arg12[%c0_41, %c0_42] : memref<32x16xbf16, #tpu.memory_space<vmem>>, vector<32x16xbf16>
    %cst_43 = arith.constant dense<0.000000e+00> : vector<8x16xf32>
    %224 = tpu.matmul %222, %223, %cst_43 {dimension_numbers = #tpu.dot_dimension_numbers<[1], [0], [0], [1], [0, 0, 1, 1], [], []>} : vector<8x32xbf16>, vector<32x16xbf16>, vector<8x16xf32> -> vector<8x16xf32>
    %c0_44 = arith.constant 0 : index
    %c0_45 = arith.constant 0 : index
    %225 = vector.load %arg13[%c0_44, %c0_45] : memref<1x16xf32, #tpu.memory_space<vmem>>, vector<1x16xf32>
    %226 = vector.broadcast %225 : vector<1x16xf32> to vector<8x16xf32>
    %227 = arith.addf %224, %226 : vector<8x16xf32>
    %c0_46 = arith.constant 0 : index
    %c0_47 = arith.constant 0 : index
    %228 = vector.load %arg14[%c0_46, %c0_47] : memref<8x16xf32, #tpu.memory_space<vmem>>, vector<8x16xf32>
    tpu.vector_store %arg14[%c0_46, %c0_47], %227 {strides = array<i32>} : memref<8x16xf32, #tpu.memory_space<vmem>>, vector<8x16xf32>,
    return
  }
}

</mosaic_0001>

<llo_original>
// kernel: tpu_custom_call.1
$region0: #{tpu_custom_call.1}
  #allocation0 [shape = 'u32[]', space=smem, size = 0x4, offset = 0x4, fixed_abs, tag = 'smem constant byte address 0x4 - core index']
  #allocation1 [shape = 'u32[144,128]{1,0:T(1,128)}', space=vmem, size = 0x12000, scoped, tag = 'internal scratch']
  %s0 = inlined_call_operand.hbm [shape: f32[8,16], index: 0, kind: input, shape index: {}]
  %s1 = inlined_call_operand.vmem [shape: f32[1,128], index: 1, kind: input, shape index: {}]
  %s2 = inlined_call_operand.hbm [shape: f32[8,128], index: 2, kind: input, shape index: {}]
  %s3 = inlined_call_operand.hbm [shape: f32[8,128], index: 3, kind: input, shape index: {}]
  %s4 = inlined_call_operand.hbm [shape: bf16[16,32], index: 4, kind: input, shape index: {}]
  %s5 = inlined_call_operand.vmem [shape: f32[1,32], index: 5, kind: input, shape index: {}]
  %s6 = inlined_call_operand.hbm [shape: bf16[16,32], index: 6, kind: input, shape index: {}]
  %s7 = inlined_call_operand.vmem [shape: f32[1,32], index: 7, kind: input, shape index: {}]
  %s8 = inlined_call_operand.vmem [shape: bf16[32,128], index: 8, kind: input, shape index: {}]
  %s9 = inlined_call_operand.vmem [shape: f32[1,128], index: 9, kind: input, shape index: {}]
  %s10 = inlined_call_operand.vmem [shape: bf16[32,128], index: 10, kind: input, shape index: {}]
  %s11 = inlined_call_operand.vmem [shape: f32[1,128], index: 11, kind: input, shape index: {}]
  %s12 = inlined_call_operand.vmem [shape: bf16[32,16], index: 12, kind: input, shape index: {}]
  %s13 = inlined_call_operand.vmem [shape: f32[1,16], index: 13, kind: input, shape index: {}]
  %s14 = inlined_call_operand.hbm [shape: f32[8,16], index: 14, kind: output, shape index: {}]
  %s15 = sld [smem:[#allocation0]]
  $region86: #{tpu_custom_call.1} parent=0
    _
  %s17 = ssub.s32 1, %s15
  %s18 = scalar_select 0, %s17, %s15
  $region1: #{tpu_custom_call.1} parent=0
    #allocation2 [shape = 'u8[4096]{0}', space=vmem, size = 0x1000, scoped, tag = 'input window, operand 0, single buffered']
    #allocation3 [shape = 's32[1]{0}', space=sflag, size = 0x4, scoped, tag = 'scoped memory for tpu_custom_call.1']
    #allocation4 [shape = 's32[1]{0}', space=sflag, size = 0x4, scoped, tag = 'scoped memory for tpu_custom_call.1']
    #allocation5 [shape = 'u8[4096]{0}', space=vmem, size = 0x1000, scoped, tag = 'input window, operand 2, single buffered']
    #allocation6 [shape = 's32[1]{0}', space=sflag, size = 0x4, scoped, tag = 'scoped memory for tpu_custom_call.1']
    #allocation7 [shape = 'u8[4096]{0}', space=vmem, size = 0x1000, scoped, tag = 'input window, operand 3, single buffered']
    #allocation8 [shape = 'u8[4096]{0}', space=vmem, size = 0x1000, scoped, tag = 'input window, operand 4, single buffered']
    #allocation9 [shape = 's32[1]{0}', space=sflag, size = 0x4, scoped, tag = 'scoped memory for tpu_custom_call.1']
    #allocation10 [shape = 'u8[4096]{0}', space=vmem, size = 0x1000, scoped, tag = 'input window, operand 6, single buffered']
    #allocation11 [shape = 'u8[4096]{0}', space=vmem, size = 0x1000, scoped, tag = 'output window, operand 0, single buffered']
    %19 = vsyncpa [#allocation3], 0
    %20 = vsyncpa [#allocation6], 0
    %21 = vsyncpa [#allocation9], 0
    %22 = vsyncpa [#allocation4], 0
    // Predicated region
    $region2: #{tpu_custom_call.1} parent=1 // pred_check
      _
    $region3: #{tpu_custom_call.1} parent=1 // pred_check_branch
      %24 = sbr.rel (0) target = $region5
    $region4: #{tpu_custom_call.1} parent=1 // pred_region
      %s26 = ssub.s32 128, 128
      %27 = vsyncadd [#allocation3], %s26
      %s29 = sshll.u32 [#allocation2], 4
      %s30 = int_to_ptr.vmem [resolvable:$true] %s29
      %32 = dma.hbm_to_vmem [thread:$0]  %s0, 128, %s30, [#allocation3]
    $region5: #{tpu_custom_call.1} parent=1 // pred_fallthru
      _
    // Predicated region
    $region6: #{tpu_custom_call.1} parent=1 // pred_check
      _
    $region7: #{tpu_custom_call.1} parent=1 // pred_check_branch
      %34 = sbr.rel (0) target = $region9
    $region8: #{tpu_custom_call.1} parent=1 // pred_region
      _
    $region9: #{tpu_custom_call.1} parent=1 // pred_fallthru
      _
    // Predicated region
    $region10: #{tpu_custom_call.1} parent=1 // pred_check
      _
    $region11: #{tpu_custom_call.1} parent=1 // pred_check_branch
      %36 = sbr.rel (0) target = $region13
    $region12: #{tpu_custom_call.1} parent=1 // pred_region
      %s38 = ssub.s32 128, 128
      %39 = vsyncadd [#allocation6], %s38
      %s41 = sshll.u32 [#allocation5], 4
      %s42 = int_to_ptr.vmem [resolvable:$true] %s41
      %44 = dma.hbm_to_vmem [thread:$0]  %s2, 128, %s42, [#allocation6]
    $region13: #{tpu_custom_call.1} parent=1 // pred_fallthru
      _
    // Predicated region
    $region14: #{tpu_custom_call.1} parent=1 // pred_check
      _
    $region15: #{tpu_custom_call.1} parent=1 // pred_check_branch
      %46 = sbr.rel (0) target = $region17
    $region16: #{tpu_custom_call.1} parent=1 // pred_region
      %s48 = ssub.s32 128, 128
      %49 = vsyncadd [#allocation6], %s48
      %s51 = sshll.u32 [#allocation7], 4
      %s52 = int_to_ptr.vmem [resolvable:$true] %s51
      %54 = dma.hbm_to_vmem [thread:$0]  %s3, 128, %s52, [#allocation6]
    $region17: #{tpu_custom_call.1} parent=1 // pred_fallthru
      _
    // Predicated region
    $region18: #{tpu_custom_call.1} parent=1 // pred_check
      _
    $region19: #{tpu_custom_call.1} parent=1 // pred_check_branch
      %56 = sbr.rel (0) target = $region21
    $region20: #{tpu_custom_call.1} parent=1 // pred_region
      %s58 = ssub.s32 128, 128
      %59 = vsyncadd [#allocation9], %s58
      %s60 = sshll.u32 [#allocation8], 4
      %s61 = int_to_ptr.vmem [resolvable:$true] %s60
      %66 = dma.hbm_to_vmem [thread:$0]  %s4, 128, %s61, [#allocation9], 64, 64, 4
    $region21: #{tpu_custom_call.1} parent=1 // pred_fallthru
      _
    // Predicated region
    $region22: #{tpu_custom_call.1} parent=1 // pred_check
      _
    $region23: #{tpu_custom_call.1} parent=1 // pred_check_branch
      %68 = sbr.rel (0) target = $region25
    $region24: #{tpu_custom_call.1} parent=1 // pred_region
      _
    $region25: #{tpu_custom_call.1} parent=1 // pred_fallthru
      _
    // Predicated region
    $region26: #{tpu_custom_call.1} parent=1 // pred_check
      _
    $region27: #{tpu_custom_call.1} parent=1 // pred_check_branch
      %70 = sbr.rel (0) target = $region29
    $region28: #{tpu_custom_call.1} parent=1 // pred_region
      %s72 = ssub.s32 128, 128
      %73 = vsyncadd [#allocation9], %s72
      %s74 = sshll.u32 [#allocation10], 4
      %s75 = int_to_ptr.vmem [resolvable:$true] %s74
      %80 = dma.hbm_to_vmem [thread:$0]  %s6, 128, %s75, [#allocation9], 64, 64, 4
    $region29: #{tpu_custom_call.1} parent=1 // pred_fallthru
      _
    // Predicated region
    $region30: #{tpu_custom_call.1} parent=1 // pred_check
      _
    $region31: #{tpu_custom_call.1} parent=1 // pred_check_branch
      %82 = sbr.rel (0) target = $region33
    $region32: #{tpu_custom_call.1} parent=1 // pred_region
      _
    $region33: #{tpu_custom_call.1} parent=1 // pred_fallthru
      _
    // Predicated region
    $region34: #{tpu_custom_call.1} parent=1 // pred_check
      _
    $region35: #{tpu_custom_call.1} parent=1 // pred_check_branch
      %84 = sbr.rel (0) target = $region37
    $region36: #{tpu_custom_call.1} parent=1 // pred_region
      _
    $region37: #{tpu_custom_call.1} parent=1 // pred_fallthru
      _
    // Predicated region
    $region38: #{tpu_custom_call.1} parent=1 // pred_check
      _
    $region39: #{tpu_custom_call.1} parent=1 // pred_check_branch
      %86 = sbr.rel (0) target = $region41
    $region40: #{tpu_custom_call.1} parent=1 // pred_region
      _
    $region41: #{tpu_custom_call.1} parent=1 // pred_fallthru
      _
    // Predicated region
    $region42: #{tpu_custom_call.1} parent=1 // pred_check
      _
    $region43: #{tpu_custom_call.1} parent=1 // pred_check_branch
      %88 = sbr.rel (0) target = $region45
    $region44: #{tpu_custom_call.1} parent=1 // pred_region
      _
    $region45: #{tpu_custom_call.1} parent=1 // pred_fallthru
      _
    // Predicated region
    $region46: #{tpu_custom_call.1} parent=1 // pred_check
      _
    $region47: #{tpu_custom_call.1} parent=1 // pred_check_branch
      %90 = sbr.rel (0) target = $region49
    $region48: #{tpu_custom_call.1} parent=1 // pred_region
      _
    $region49: #{tpu_custom_call.1} parent=1 // pred_fallthru
      _
    // Predicated region
    $region50: #{tpu_custom_call.1} parent=1 // pred_check
      _
    $region51: #{tpu_custom_call.1} parent=1 // pred_check_branch
      %92 = sbr.rel (0) target = $region53
    $region52: #{tpu_custom_call.1} parent=1 // pred_region
      _
    $region53: #{tpu_custom_call.1} parent=1 // pred_fallthru
      _
    // Predicated region
    $region54: #{tpu_custom_call.1} parent=1 // pred_check
      _
    $region55: #{tpu_custom_call.1} parent=1 // pred_check_branch
      %94 = sbr.rel (0) target = $region57
    $region56: #{tpu_custom_call.1} parent=1 // pred_region
      _
    $region57: #{tpu_custom_call.1} parent=1 // pred_fallthru
      _
    // Predicated region
    $region58: #{tpu_custom_call.1} parent=1 // pred_check
      _
    $region59: #{tpu_custom_call.1} parent=1 // pred_check_branch
      %96 = sbr.rel (0) target = $region61
    $region60: #{tpu_custom_call.1} parent=1 // pred_region
      %97 = dma.done [#allocation3], 128
    $region61: #{tpu_custom_call.1} parent=1 // pred_fallthru
      _
    // Predicated region
    $region62: #{tpu_custom_call.1} parent=1 // pred_check
      _
    $region63: #{tpu_custom_call.1} parent=1 // pred_check_branch
      %99 = sbr.rel (0) target = $region65
    $region64: #{tpu_custom_call.1} parent=1 // pred_region
      %100 = dma.done [#allocation6], 128
    $region65: #{tpu_custom_call.1} parent=1 // pred_fallthru
      _
    // Predicated region
    $region66: #{tpu_custom_call.1} parent=1 // pred_check
      _
    $region67: #{tpu_custom_call.1} parent=1 // pred_check_branch
      %102 = sbr.rel (0) target = $region69
    $region68: #{tpu_custom_call.1} parent=1 // pred_region
      %103 = dma.done [#allocation6], 128
    $region69: #{tpu_custom_call.1} parent=1 // pred_fallthru
      _
    // Predicated region
    $region70: #{tpu_custom_call.1} parent=1 // pred_check
      _
    $region71: #{tpu_custom_call.1} parent=1 // pred_check_branch
      %105 = sbr.rel (0) target = $region73
    $region72: #{tpu_custom_call.1} parent=1 // pred_region
      %106 = dma.done [#allocation9], 128
    $region73: #{tpu_custom_call.1} parent=1 // pred_fallthru
      _
    // Predicated region
    $region74: #{tpu_custom_call.1} parent=1 // pred_check
      _
    $region75: #{tpu_custom_call.1} parent=1 // pred_check_branch
      %108 = sbr.rel (0) target = $region77
    $region76: #{tpu_custom_call.1} parent=1 // pred_region
      %109 = dma.done [#allocation9], 128
    $region77: #{tpu_custom_call.1} parent=1 // pred_fallthru
      _
    %v111 = vld [vmem:[#allocation2] sm:$0xff]
    %v112 = vpack.c.bf16 %v111, %v111
    %v113 = vld [vmem:[#allocation8] sm:$0xf]
    %v114 = vld [vmem:[#allocation8 + $0x4] sm:$0xf]
    %v115 = vld [vmem:[%s5] sm:$0x1]
    %v117 = vlaneseq
    %v118 = vshrl.u32 %v117, 7
    %v119 = vsub.s32 0, %v118
    %v120 = vrot.slane %v115, %v119
    %v124 = vunpack.c.l.b16 %v113
    %v125 = vunpack.c.l.b16 %v114
    %v126 = vpack.c.b16 %v125, %v124
    %vm128 = vcmask 130048
    %v130 = vsel %vm128, %v112, 0
    %132 = vmatprep.subr.bf16.mxu0 0
    %133 = vmatpush1.bf16.msra.mxu0 %v126
    %134 = vmatprep.subr.bf16.mxu0 0
    %135 = vmatpush1.bf16.msra.mxu0 0
    %136 = vmatprep.subr.bf16.mxu0 0
    %137 = vmatpush1.bf16.msra.mxu0 0
    %138 = vmatprep.subr.bf16.mxu0 0
    %139 = vmatpush1.bf16.msra.mxu0 0
    %140 = vmatprep.subr.bf16.mxu0 0
    %141 = vmatpush1.bf16.msra.mxu0 0
    %142 = vmatprep.subr.bf16.mxu0 0
    %143 = vmatpush1.bf16.msra.mxu0 0
    %144 = vmatprep.subr.bf16.mxu0 0
    %145 = vmatpush1.bf16.msra.mxu0 0
    %146 = vmatprep.subr.bf16.mxu0 0
    %147 = vmatpush1.bf16.msra.mxu0 0
    %148 = vmatprep.subr.bf16.mxu0 0
    %149 = vmatpush1.bf16.msra.mxu0 0
    %150 = vmatprep.subr.bf16.mxu0 0
    %151 = vmatpush1.bf16.msra.mxu0 0
    %152 = vmatprep.subr.bf16.mxu0 0
    %153 = vmatpush1.bf16.msra.mxu0 0
    %154 = vmatprep.subr.bf16.mxu0 0
    %155 = vmatpush1.bf16.msra.mxu0 0
    %156 = vmatprep.subr.bf16.mxu0 0
    %157 = vmatpush1.bf16.msra.mxu0 0
    %158 = vmatprep.subr.bf16.mxu0 0
    %159 = vmatpush1.bf16.msra.mxu0 0
    %160 = vmatprep.subr.bf16.mxu0 0
    %161 = vmatpush1.bf16.msra.mxu0 0
    %162 = vmatprep.subr.bf16.mxu0 0
    %163 = vmatpush1.bf16.msra.mxu0 0
    %164 = vmatprep.mubr.bf16.mxu0 0
    %165 = vmatmul.mubr.bf16.gmra.mrb[0].mxu0 %v130
    %v166 = vpop.f32.mrb[0].mxu0
    %v167 = vadd.f32 %v120, %v166
    %v168 = vpop.f32.mrb[0].mxu0
    %v169 = vpop.f32.mrb[0].mxu0
    %v170 = vpop.f32.mrb[0].mxu0
    %171 = vdwg.mxu0
    %v172 = vtanh.pop %v167
    %v173 = vld [vmem:[#allocation10] sm:$0xf]
    %v174 = vld [vmem:[#allocation10 + $0x4] sm:$0xf]
    %v175 = vld [vmem:[%s7] sm:$0x1]
    %v177 = vlaneseq
    %v178 = vshrl.u32 %v177, 7
    %v179 = vsub.s32 0, %v178
    %v180 = vrot.slane %v175, %v179
    %v184 = vunpack.c.l.b16 %v173
    %v185 = vunpack.c.l.b16 %v174
    %v186 = vpack.c.b16 %v185, %v184
    %188 = vmatprep.subr.bf16.mxu0 0
    %189 = vmatpush1.bf16.msra.mxu0 %v186
    %190 = vmatprep.subr.bf16.mxu0 0
    %191 = vmatpush1.bf16.msra.mxu0 0
    %192 = vmatprep.subr.bf16.mxu0 0
    %193 = vmatpush1.bf16.msra.mxu0 0
    %194 = vmatprep.subr.bf16.mxu0 0
    %195 = vmatpush1.bf16.msra.mxu0 0
    %196 = vmatprep.subr.bf16.mxu0 0
    %197 = vmatpush1.bf16.msra.mxu0 0
    %198 = vmatprep.subr.bf16.mxu0 0
    %199 = vmatpush1.bf16.msra.mxu0 0
    %200 = vmatprep.subr.bf16.mxu0 0
    %201 = vmatpush1.bf16.msra.mxu0 0
    %202 = vmatprep.subr.bf16.mxu0 0
    %203 = vmatpush1.bf16.msra.mxu0 0
    %204 = vmatprep.subr.bf16.mxu0 0
    %205 = vmatpush1.bf16.msra.mxu0 0
    %206 = vmatprep.subr.bf16.mxu0 0
    %207 = vmatpush1.bf16.msra.mxu0 0
    %208 = vmatprep.subr.bf16.mxu0 0
    %209 = vmatpush1.bf16.msra.mxu0 0
    %210 = vmatprep.subr.bf16.mxu0 0
    %211 = vmatpush1.bf16.msra.mxu0 0
    %212 = vmatprep.subr.bf16.mxu0 0
    %213 = vmatpush1.bf16.msra.mxu0 0
    %214 = vmatprep.subr.bf16.mxu0 0
    %215 = vmatpush1.bf16.msra.mxu0 0
    %216 = vmatprep.subr.bf16.mxu0 0
    %217 = vmatpush1.bf16.msra.mxu0 0
    %218 = vmatprep.subr.bf16.mxu0 0
    %219 = vmatpush1.bf16.msra.mxu0 0
    %220 = vmatprep.mubr.bf16.mxu0 0
    %221 = vmatmul.mubr.bf16.gmra.mrb[0].mxu0 %v130
    %v222 = vpop.f32.mrb[0].mxu0
    %v223 = vadd.f32 %v180, %v222
    %v224 = vpop.f32.mrb[0].mxu0
    %v225 = vpop.f32.mrb[0].mxu0
    %v226 = vpop.f32.mrb[0].mxu0
    %227 = vdwg.mxu0
    %v228 = vtanh.pop %v223
    %v229 = vpack.c.bf16 %v172, %v172
    %v230 = vld [vmem:[%s8] sm:$0xf]
    %v231 = vld [vmem:[%s8 + $0x4] sm:$0xf]
    %v232 = vld [vmem:[%s8 + $0x8] sm:$0xf]
    %v233 = vld [vmem:[%s8 + $0xc] sm:$0xf]
    %v234 = vld [vmem:[%s9] sm:$0x1]
    %v236 = vlaneseq
    %v237 = vshrl.u32 %v236, 7
    %v238 = vsub.s32 0, %v237
    %v239 = vrot.slane %v234, %v238
    %v245 = vunpack.c.l.b16 %v230
    %v246 = vunpack.c.l.b16 %v231
    %v247 = vunpack.c.l.b16 %v232
    %v248 = vunpack.c.l.b16 %v233
    %v249 = vpack.c.b16 %v246, %v245
    %v250 = vpack.c.b16 %v248, %v247
    %vm253 = vcmask 261120
    %v255 = vsel %vm253, %v229, 0
    %257 = vmatprep.subr.bf16.mxu0 0
    %258 = vmatpush1.bf16.msra.mxu0 %v249
    %259 = vmatprep.subr.bf16.mxu0 0
    %260 = vmatpush1.bf16.msra.mxu0 %v250
    %261 = vmatprep.subr.bf16.mxu0 0
    %262 = vmatpush1.bf16.msra.mxu0 0
    %263 = vmatprep.subr.bf16.mxu0 0
    %264 = vmatpush1.bf16.msra.mxu0 0
    %265 = vmatprep.subr.bf16.mxu0 0
    %266 = vmatpush1.bf16.msra.mxu0 0
    %267 = vmatprep.subr.bf16.mxu0 0
    %268 = vmatpush1.bf16.msra.mxu0 0
    %269 = vmatprep.subr.bf16.mxu0 0
    %270 = vmatpush1.bf16.msra.mxu0 0
    %271 = vmatprep.subr.bf16.mxu0 0
    %272 = vmatpush1.bf16.msra.mxu0 0
    %273 = vmatprep.subr.bf16.mxu0 0
    %274 = vmatpush1.bf16.msra.mxu0 0
    %275 = vmatprep.subr.bf16.mxu0 0
    %276 = vmatpush1.bf16.msra.mxu0 0
    %277 = vmatprep.subr.bf16.mxu0 0
    %278 = vmatpush1.bf16.msra.mxu0 0
    %279 = vmatprep.subr.bf16.mxu0 0
    %280 = vmatpush1.bf16.msra.mxu0 0
    %281 = vmatprep.subr.bf16.mxu0 0
    %282 = vmatpush1.bf16.msra.mxu0 0
    %283 = vmatprep.subr.bf16.mxu0 0
    %284 = vmatpush1.bf16.msra.mxu0 0
    %285 = vmatprep.subr.bf16.mxu0 0
    %286 = vmatpush1.bf16.msra.mxu0 0
    %287 = vmatprep.subr.bf16.mxu0 0
    %288 = vmatpush1.bf16.msra.mxu0 0
    %289 = vmatprep.mubr.bf16.mxu0 0
    %290 = vmatmul.mubr.bf16.gmra.mrb[0].mxu0 %v255
    %v291 = vpop.f32.mrb[0].mxu0
    %v292 = vadd.f32 %v239, %v291
    %v293 = vpop.f32.mrb[0].mxu0
    %v294 = vpop.f32.mrb[0].mxu0
    %v295 = vpop.f32.mrb[0].mxu0
    %296 = vdwg.mxu0
    %v297 = vld [vmem:[#allocation7] sm:$0xff]
    %vm298 = vcmp.gt.f32.partialorder %v297, 0.5
    %v299 = vld [vmem:[#allocation5] sm:$0xff]
    %v300 = vld [vmem:[%s10] sm:$0xf]
    %v301 = vld [vmem:[%s10 + $0x4] sm:$0xf]
    %v302 = vld [vmem:[%s10 + $0x8] sm:$0xf]
    %v303 = vld [vmem:[%s10 + $0xc] sm:$0xf]
    %v304 = vld [vmem:[%s11] sm:$0x1]
    %v305 = vld [vmem:[%s1] sm:$0x1]
    %v306 = vadd.f32 %v305, %v292
    %v307 = vxor.u32 %v306, 2147483648
    %v308 = vmul.f32 %v307, 1.442695
    %v309 = vpow.pop %v308
    %v310 = vadd.f32 %v309, 1.0
    %v311 = vrcp.pop %v310
    %v312 = vmul.f32 1.0, %v311
    %v313 = vtanh.pop %v306
    %v316 = vunpack.c.l.s4 1966171168
    %v317 = vunpack.c.0.s8 %v316
    %v318 = vlaneseq
    %v319 = vshrl.u32 %v318, 7
    %v320 = vsub.s32 %v317, %v319
    %v321 = vrot.slane %v228, %v320
    %v323 = vunpack.c.l.s4 1966171168
    %v324 = vunpack.c.0.s8 %v323
    %v325 = vlaneseq
    %v326 = vshrl.u32 %v325, 7
    %v327 = vsub.s32 %v324, %v326
    %v328 = vrot.slane %v321, %v327
    %329 = vrot.lane.b32.xlu0 %v328, 32
    %v330 = vpop.permute.xlu0 %329
    %v332 = vmul.f32 %v312, %v330
    %334 = vrot.lane.b32.xlu0 %v313, 32
    %v335 = vpop.permute.xlu0 %334
    %v337 = vmul.f32 %v312, %v335
    %339 = vrot.lane.b32.xlu0 %v337, 32
    %v340 = vpop.permute.xlu0 %339
    %v342 = vadd.f32 %v332, %v340
    %v343 = vtanh.pop %v342
    %345 = vrot.lane.b32.xlu0 %v343, 32
    %v346 = vpop.permute.xlu0 %345
    %v348 = vmul.f32 %v312, %v346
    %v349 = vpack.c.bf16 %v348, %v348
    %351 = vrot.lane.b32.xlu0 %v349, 64
    %v352 = vpop.permute.xlu0 %351
    %v357 = vunpack.c.l.b16 %v300
    %v358 = vunpack.c.l.b16 %v301
    %v359 = vunpack.c.l.b16 %v302
    %v360 = vunpack.c.l.b16 %v303
    %v361 = vpack.c.b16 %v358, %v357
    %v362 = vpack.c.b16 %v360, %v359
    %v366 = vsel %vm253, %v352, 0
    %368 = vmatprep.subr.bf16.mxu0 0
    %369 = vmatpush1.bf16.msra.mxu0 %v361
    %370 = vmatprep.subr.bf16.mxu0 0
    %371 = vmatpush1.bf16.msra.mxu0 %v362
    %372 = vmatprep.subr.bf16.mxu0 0
    %373 = vmatpush1.bf16.msra.mxu0 0
    %374 = vmatprep.subr.bf16.mxu0 0
    %375 = vmatpush1.bf16.msra.mxu0 0
    %376 = vmatprep.subr.bf16.mxu0 0
    %377 = vmatpush1.bf16.msra.mxu0 0
    %378 = vmatprep.subr.bf16.mxu0 0
    %379 = vmatpush1.bf16.msra.mxu0 0
    %380 = vmatprep.subr.bf16.mxu0 0
    %381 = vmatpush1.bf16.msra.mxu0 0
    %382 = vmatprep.subr.bf16.mxu0 0
    %383 = vmatpush1.bf16.msra.mxu0 0
    %384 = vmatprep.subr.bf16.mxu0 0
    %385 = vmatpush1.bf16.msra.mxu0 0
    %386 = vmatprep.subr.bf16.mxu0 0
    %387 = vmatpush1.bf16.msra.mxu0 0
    %388 = vmatprep.subr.bf16.mxu0 0
    %389 = vmatpush1.bf16.msra.mxu0 0
    %390 = vmatprep.subr.bf16.mxu0 0
    %391 = vmatpush1.bf16.msra.mxu0 0
    %392 = vmatprep.subr.bf16.mxu0 0
    %393 = vmatpush1.bf16.msra.mxu0 0
    %394 = vmatprep.subr.bf16.mxu0 0
    %395 = vmatpush1.bf16.msra.mxu0 0
    %396 = vmatprep.subr.bf16.mxu0 0
    %397 = vmatpush1.bf16.msra.mxu0 0
    %398 = vmatprep.subr.bf16.mxu0 0
    %399 = vmatpush1.bf16.msra.mxu0 0
    %400 = vmatprep.mubr.bf16.mxu0 0
    %401 = vmatmul.mubr.bf16.gmra.mrb[0].mxu0 %v366
    %v402 = vpop.f32.mrb[0].mxu0
    %v403 = vadd.f32 %v304, %v402
    %v404 = vpop.f32.mrb[0].mxu0
    %v405 = vpop.f32.mrb[0].mxu0
    %v406 = vpop.f32.mrb[0].mxu0
    %407 = vdwg.mxu0
    %v408 = vsel %vm298, %v299, %v403
    %v410 = vrot.slane %v292, 1
    %v412 = vadd.f32 %v408, %v410
    %v413 = vxor.u32 %v412, 2147483648
    %v414 = vmul.f32 %v413, 1.442695
    %v415 = vpow.pop %v414
    %v416 = vadd.f32 %v415, 1.0
    %v417 = vrcp.pop %v416
    %v418 = vmul.f32 1.0, %v417
    %v419 = vtanh.pop %v412
    %v420 = vrot.slane %v228, 1
    %421 = vrot.lane.b32.xlu0 %v420, 32
    %v422 = vpop.permute.xlu0 %421
    %v424 = vmul.f32 %v418, %v422
    %426 = vrot.lane.b32.xlu0 %v419, 32
    %v427 = vpop.permute.xlu0 %426
    %v429 = vmul.f32 %v418, %v427
    %431 = vrot.lane.b32.xlu0 %v429, 32
    %v432 = vpop.permute.xlu0 %431
    %v434 = vadd.f32 %v424, %v432
    %v435 = vtanh.pop %v434
    %437 = vrot.lane.b32.xlu0 %v435, 32
    %v438 = vpop.permute.xlu0 %437
    %v440 = vmul.f32 %v418, %v438
    %v441 = vpack.c.bf16 %v440, %v440
    %443 = vrot.lane.b32.xlu0 %v441, 64
    %v444 = vpop.permute.xlu0 %443
    %v446 = vsel %vm253, %v444, 0
    %448 = vmatprep.subr.bf16.mxu0 0
    %449 = vmatpush1.bf16.msra.mxu0 %v361
    %450 = vmatprep.subr.bf16.mxu0 0
    %451 = vmatpush1.bf16.msra.mxu0 %v362
    %452 = vmatprep.subr.bf16.mxu0 0
    %453 = vmatpush1.bf16.msra.mxu0 0
    %454 = vmatprep.subr.bf16.mxu0 0
    %455 = vmatpush1.bf16.msra.mxu0 0
    %456 = vmatprep.subr.bf16.mxu0 0
    %457 = vmatpush1.bf16.msra.mxu0 0
    %458 = vmatprep.subr.bf16.mxu0 0
    %459 = vmatpush1.bf16.msra.mxu0 0
    %460 = vmatprep.subr.bf16.mxu0 0
    %461 = vmatpush1.bf16.msra.mxu0 0
    %462 = vmatprep.subr.bf16.mxu0 0
    %463 = vmatpush1.bf16.msra.mxu0 0
    %464 = vmatprep.subr.bf16.mxu0 0
    %465 = vmatpush1.bf16.msra.mxu0 0
    %466 = vmatprep.subr.bf16.mxu0 0
    %467 = vmatpush1.bf16.msra.mxu0 0
    %468 = vmatprep.subr.bf16.mxu0 0
    %469 = vmatpush1.bf16.msra.mxu0 0
    %470 = vmatprep.subr.bf16.mxu0 0
    %471 = vmatpush1.bf16.msra.mxu0 0
    %472 = vmatprep.subr.bf16.mxu0 0
    %473 = vmatpush1.bf16.msra.mxu0 0
    %474 = vmatprep.subr.bf16.mxu0 0
    %475 = vmatpush1.bf16.msra.mxu0 0
    %476 = vmatprep.subr.bf16.mxu0 0
    %477 = vmatpush1.bf16.msra.mxu0 0
    %478 = vmatprep.subr.bf16.mxu0 0
    %479 = vmatpush1.bf16.msra.mxu0 0
    %480 = vmatprep.mubr.bf16.mxu0 0
    %481 = vmatmul.mubr.bf16.gmra.mrb[0].mxu0 %v446
    %v482 = vpop.f32.mrb[0].mxu0
    %v483 = vadd.f32 %v304, %v482
    %v484 = vpop.f32.mrb[0].mxu0
    %v485 = vpop.f32.mrb[0].mxu0
    %v486 = vpop.f32.mrb[0].mxu0
    %487 = vdwg.mxu0
    %v489 = vrot.slane %v483, 7
    %v491 = vsel %vm298, %v299, %v489
    %v492 = vadd.f32 %v491, %v410
    %v493 = vxor.u32 %v492, 2147483648
    %v494 = vmul.f32 %v493, 1.442695
    %v495 = vpow.pop %v494
    %v496 = vadd.f32 %v495, 1.0
    %v497 = vrcp.pop %v496
    %v498 = vmul.f32 1.0, %v497
    %v499 = vtanh.pop %v492
    %v500 = vmul.f32 %v498, %v422
    %502 = vrot.lane.b32.xlu0 %v499, 32
    %v503 = vpop.permute.xlu0 %502
    %v505 = vmul.f32 %v498, %v503
    %507 = vrot.lane.b32.xlu0 %v505, 32
    %v508 = vpop.permute.xlu0 %507
    %v510 = vadd.f32 %v500, %v508
    %v511 = vtanh.pop %v510
    %513 = vrot.lane.b32.xlu0 %v511, 32
    %v514 = vpop.permute.xlu0 %513
    %v516 = vmul.f32 %v498, %v514
    %v517 = vpack.c.bf16 %v516, %v516
    %v519 = vshrl.u32 %v517, 16
    %521 = vrot.lane.b32.xlu0 %v519, 64
    %v522 = vpop.permute.xlu0 %521
    %v524 = vsel %vm253, %v522, 0
    %526 = vmatprep.subr.bf16.mxu0 0
    %527 = vmatpush1.bf16.msra.mxu0 %v361
    %528 = vmatprep.subr.bf16.mxu0 0
    %529 = vmatpush1.bf16.msra.mxu0 %v362
    %530 = vmatprep.subr.bf16.mxu0 0
    %531 = vmatpush1.bf16.msra.mxu0 0
    %532 = vmatprep.subr.bf16.mxu0 0
    %533 = vmatpush1.bf16.msra.mxu0 0
    %534 = vmatprep.subr.bf16.mxu0 0
    %535 = vmatpush1.bf16.msra.mxu0 0
    %536 = vmatprep.subr.bf16.mxu0 0
    %537 = vmatpush1.bf16.msra.mxu0 0
    %538 = vmatprep.subr.bf16.mxu0 0
    %539 = vmatpush1.bf16.msra.mxu0 0
    %540 = vmatprep.subr.bf16.mxu0 0
    %541 = vmatpush1.bf16.msra.mxu0 0
    %542 = vmatprep.subr.bf16.mxu0 0
    %543 = vmatpush1.bf16.msra.mxu0 0
    %544 = vmatprep.subr.bf16.mxu0 0
    %545 = vmatpush1.bf16.msra.mxu0 0
    %546 = vmatprep.subr.bf16.mxu0 0
    %547 = vmatpush1.bf16.msra.mxu0 0
    %548 = vmatprep.subr.bf16.mxu0 0
    %549 = vmatpush1.bf16.msra.mxu0 0
    %550 = vmatprep.subr.bf16.mxu0 0
    %551 = vmatpush1.bf16.msra.mxu0 0
    %552 = vmatprep.subr.bf16.mxu0 0
    %553 = vmatpush1.bf16.msra.mxu0 0
    %554 = vmatprep.subr.bf16.mxu0 0
    %555 = vmatpush1.bf16.msra.mxu0 0
    %556 = vmatprep.subr.bf16.mxu0 0
    %557 = vmatpush1.bf16.msra.mxu0 0
    %558 = vmatprep.mubr.bf16.mxu0 0
    %559 = vmatmul.mubr.bf16.gmra.mrb[0].mxu0 %v524
    %v560 = vpop.f32.mrb[0].mxu0
    %v561 = vadd.f32 %v304, %v560
    %v562 = vpop.f32.mrb[0].mxu0
    %v563 = vpop.f32.mrb[0].mxu0
    %v564 = vpop.f32.mrb[0].mxu0
    %565 = vdwg.mxu0
    %v567 = vrot.slane %v561, 6
    %v569 = vsel %vm298, %v299, %v567
    %v570 = vadd.f32 %v569, %v410
    %v571 = vxor.u32 %v570, 2147483648
    %v572 = vmul.f32 %v571, 1.442695
    %v573 = vpow.pop %v572
    %v574 = vadd.f32 %v573, 1.0
    %v575 = vrcp.pop %v574
    %v576 = vmul.f32 1.0, %v575
    %v577 = vtanh.pop %v570
    %v578 = vmul.f32 %v576, %v422
    %580 = vrot.lane.b32.xlu0 %v577, 32
    %v581 = vpop.permute.xlu0 %580
    %v583 = vmul.f32 %v576, %v581
    %585 = vrot.lane.b32.xlu0 %v583, 32
    %v586 = vpop.permute.xlu0 %585
    %v588 = vadd.f32 %v578, %v586
    %v589 = vtanh.pop %v588
    %591 = vrot.lane.b32.xlu0 %v589, 32
    %v592 = vpop.permute.xlu0 %591
    %v594 = vmul.f32 %v576, %v592
    %v595 = vpack.c.bf16 %v594, %v594
    %v597 = vrot.slane %v595, 1
    %598 = vrot.lane.b32.xlu0 %v597, 64
    %v599 = vpop.permute.xlu0 %598
    %v601 = vsel %vm253, %v599, 0
    %603 = vmatprep.subr.bf16.mxu0 0
    %604 = vmatpush1.bf16.msra.mxu0 %v361
    %605 = vmatprep.subr.bf16.mxu0 0
    %606 = vmatpush1.bf16.msra.mxu0 %v362
    %607 = vmatprep.subr.bf16.mxu0 0
    %608 = vmatpush1.bf16.msra.mxu0 0
    %609 = vmatprep.subr.bf16.mxu0 0
    %610 = vmatpush1.bf16.msra.mxu0 0
    %611 = vmatprep.subr.bf16.mxu0 0
    %612 = vmatpush1.bf16.msra.mxu0 0
    %613 = vmatprep.subr.bf16.mxu0 0
    %614 = vmatpush1.bf16.msra.mxu0 0
    %615 = vmatprep.subr.bf16.mxu0 0
    %616 = vmatpush1.bf16.msra.mxu0 0
    %617 = vmatprep.subr.bf16.mxu0 0
    %618 = vmatpush1.bf16.msra.mxu0 0
    %619 = vmatprep.subr.bf16.mxu0 0
    %620 = vmatpush1.bf16.msra.mxu0 0
    %621 = vmatprep.subr.bf16.mxu0 0
    %622 = vmatpush1.bf16.msra.mxu0 0
    %623 = vmatprep.subr.bf16.mxu0 0
    %624 = vmatpush1.bf16.msra.mxu0 0
    %625 = vmatprep.subr.bf16.mxu0 0
    %626 = vmatpush1.bf16.msra.mxu0 0
    %627 = vmatprep.subr.bf16.mxu0 0
    %628 = vmatpush1.bf16.msra.mxu0 0
    %629 = vmatprep.subr.bf16.mxu0 0
    %630 = vmatpush1.bf16.msra.mxu0 0
    %631 = vmatprep.subr.bf16.mxu0 0
    %632 = vmatpush1.bf16.msra.mxu0 0
    %633 = vmatprep.subr.bf16.mxu0 0
    %634 = vmatpush1.bf16.msra.mxu0 0
    %635 = vmatprep.mubr.bf16.mxu0 0
    %636 = vmatmul.mubr.bf16.gmra.mrb[0].mxu0 %v601
    %v637 = vpop.f32.mrb[0].mxu0
    %v638 = vadd.f32 %v304, %v637
    %v639 = vpop.f32.mrb[0].mxu0
    %v640 = vpop.f32.mrb[0].mxu0
    %v641 = vpop.f32.mrb[0].mxu0
    %642 = vdwg.mxu0
    %v644 = vrot.slane %v638, 5
    %v646 = vsel %vm298, %v299, %v644
    %v647 = vadd.f32 %v646, %v410
    %v648 = vxor.u32 %v647, 2147483648
    %v649 = vmul.f32 %v648, 1.442695
    %v650 = vpow.pop %v649
    %v651 = vadd.f32 %v650, 1.0
    %v652 = vrcp.pop %v651
    %v653 = vmul.f32 1.0, %v652
    %v654 = vtanh.pop %v647
    %v655 = vmul.f32 %v653, %v422
    %657 = vrot.lane.b32.xlu0 %v654, 32
    %v658 = vpop.permute.xlu0 %657
    %v660 = vmul.f32 %v653, %v658
    %662 = vrot.lane.b32.xlu0 %v660, 32
    %v663 = vpop.permute.xlu0 %662
    %v665 = vadd.f32 %v655, %v663
    %v666 = vtanh.pop %v665
    %668 = vrot.lane.b32.xlu0 %v666, 32
    %v669 = vpop.permute.xlu0 %668
    %v671 = vmul.f32 %v653, %v669
    %v672 = vpack.c.bf16 %v671, %v671
    %v674 = vshrl.u32 %v672, 16
    %v676 = vrot.slane %v674, 1
    %677 = vrot.lane.b32.xlu0 %v676, 64
    %v678 = vpop.permute.xlu0 %677
    %v680 = vsel %vm253, %v678, 0
    %682 = vmatprep.subr.bf16.mxu0 0
    %683 = vmatpush1.bf16.msra.mxu0 %v361
    %684 = vmatprep.subr.bf16.mxu0 0
    %685 = vmatpush1.bf16.msra.mxu0 %v362
    %686 = vmatprep.subr.bf16.mxu0 0
    %687 = vmatpush1.bf16.msra.mxu0 0
    %688 = vmatprep.subr.bf16.mxu0 0
    %689 = vmatpush1.bf16.msra.mxu0 0
    %690 = vmatprep.subr.bf16.mxu0 0
    %691 = vmatpush1.bf16.msra.mxu0 0
    %692 = vmatprep.subr.bf16.mxu0 0
    %693 = vmatpush1.bf16.msra.mxu0 0
    %694 = vmatprep.subr.bf16.mxu0 0
    %695 = vmatpush1.bf16.msra.mxu0 0
    %696 = vmatprep.subr.bf16.mxu0 0
    %697 = vmatpush1.bf16.msra.mxu0 0
    %698 = vmatprep.subr.bf16.mxu0 0
    %699 = vmatpush1.bf16.msra.mxu0 0
    %700 = vmatprep.subr.bf16.mxu0 0
    %701 = vmatpush1.bf16.msra.mxu0 0
    %702 = vmatprep.subr.bf16.mxu0 0
    %703 = vmatpush1.bf16.msra.mxu0 0
    %704 = vmatprep.subr.bf16.mxu0 0
    %705 = vmatpush1.bf16.msra.mxu0 0
    %706 = vmatprep.subr.bf16.mxu0 0
    %707 = vmatpush1.bf16.msra.mxu0 0
    %708 = vmatprep.subr.bf16.mxu0 0
    %709 = vmatpush1.bf16.msra.mxu0 0
    %710 = vmatprep.subr.bf16.mxu0 0
    %711 = vmatpush1.bf16.msra.mxu0 0
    %712 = vmatprep.subr.bf16.mxu0 0
    %713 = vmatpush1.bf16.msra.mxu0 0
    %714 = vmatprep.mubr.bf16.mxu0 0
    %715 = vmatmul.mubr.bf16.gmra.mrb[0].mxu0 %v680
    %v716 = vpop.f32.mrb[0].mxu0
    %v717 = vadd.f32 %v304, %v716
    %v718 = vpop.f32.mrb[0].mxu0
    %v719 = vpop.f32.mrb[0].mxu0
    %v720 = vpop.f32.mrb[0].mxu0
    %721 = vdwg.mxu0
    %v723 = vrot.slane %v717, 4
    %v725 = vsel %vm298, %v299, %v723
    %v726 = vadd.f32 %v725, %v410
    %v727 = vxor.u32 %v726, 2147483648
    %v728 = vmul.f32 %v727, 1.442695
    %v729 = vpow.pop %v728
    %v730 = vadd.f32 %v729, 1.0
    %v731 = vrcp.pop %v730
    %v732 = vmul.f32 1.0, %v731
    %v733 = vtanh.pop %v726
    %v734 = vmul.f32 %v732, %v422
    %736 = vrot.lane.b32.xlu0 %v733, 32
    %v737 = vpop.permute.xlu0 %736
    %v739 = vmul.f32 %v732, %v737
    %741 = vrot.lane.b32.xlu0 %v739, 32
    %v742 = vpop.permute.xlu0 %741
    %v744 = vadd.f32 %v734, %v742
    %v745 = vtanh.pop %v744
    %747 = vrot.lane.b32.xlu0 %v745, 32
    %v748 = vpop.permute.xlu0 %747
    %v750 = vmul.f32 %v732, %v748
    %v751 = vpack.c.bf16 %v750, %v750
    %v753 = vrot.slane %v751, 2
    %754 = vrot.lane.b32.xlu0 %v753, 64
    %v755 = vpop.permute.xlu0 %754
    %v757 = vsel %vm253, %v755, 0
    %759 = vmatprep.subr.bf16.mxu0 0
    %760 = vmatpush1.bf16.msra.mxu0 %v361
    %761 = vmatprep.subr.bf16.mxu0 0
    %762 = vmatpush1.bf16.msra.mxu0 %v362
    %763 = vmatprep.subr.bf16.mxu0 0
    %764 = vmatpush1.bf16.msra.mxu0 0
    %765 = vmatprep.subr.bf16.mxu0 0
    %766 = vmatpush1.bf16.msra.mxu0 0
    %767 = vmatprep.subr.bf16.mxu0 0
    %768 = vmatpush1.bf16.msra.mxu0 0
    %769 = vmatprep.subr.bf16.mxu0 0
    %770 = vmatpush1.bf16.msra.mxu0 0
    %771 = vmatprep.subr.bf16.mxu0 0
    %772 = vmatpush1.bf16.msra.mxu0 0
    %773 = vmatprep.subr.bf16.mxu0 0
    %774 = vmatpush1.bf16.msra.mxu0 0
    %775 = vmatprep.subr.bf16.mxu0 0
    %776 = vmatpush1.bf16.msra.mxu0 0
    %777 = vmatprep.subr.bf16.mxu0 0
    %778 = vmatpush1.bf16.msra.mxu0 0
    %779 = vmatprep.subr.bf16.mxu0 0
    %780 = vmatpush1.bf16.msra.mxu0 0
    %781 = vmatprep.subr.bf16.mxu0 0
    %782 = vmatpush1.bf16.msra.mxu0 0
    %783 = vmatprep.subr.bf16.mxu0 0
    %784 = vmatpush1.bf16.msra.mxu0 0
    %785 = vmatprep.subr.bf16.mxu0 0
    %786 = vmatpush1.bf16.msra.mxu0 0
    %787 = vmatprep.subr.bf16.mxu0 0
    %788 = vmatpush1.bf16.msra.mxu0 0
    %789 = vmatprep.subr.bf16.mxu0 0
    %790 = vmatpush1.bf16.msra.mxu0 0
    %791 = vmatprep.mubr.bf16.mxu0 0
    %792 = vmatmul.mubr.bf16.gmra.mrb[0].mxu0 %v757
    %v793 = vpop.f32.mrb[0].mxu0
    %v794 = vadd.f32 %v304, %v793
    %v795 = vpop.f32.mrb[0].mxu0
    %v796 = vpop.f32.mrb[0].mxu0
    %v797 = vpop.f32.mrb[0].mxu0
    %798 = vdwg.mxu0
    %v800 = vrot.slane %v794, 3
    %v802 = vsel %vm298, %v299, %v800
    %v803 = vadd.f32 %v802, %v410
    %v804 = vxor.u32 %v803, 2147483648
    %v805 = vmul.f32 %v804, 1.442695
    %v806 = vpow.pop %v805
    %v807 = vadd.f32 %v806, 1.0
    %v808 = vrcp.pop %v807
    %v809 = vmul.f32 1.0, %v808
    %v810 = vtanh.pop %v803
    %v811 = vmul.f32 %v809, %v422
    %813 = vrot.lane.b32.xlu0 %v810, 32
    %v814 = vpop.permute.xlu0 %813
    %v816 = vmul.f32 %v809, %v814
    %818 = vrot.lane.b32.xlu0 %v816, 32
    %v819 = vpop.permute.xlu0 %818
    %v821 = vadd.f32 %v811, %v819
    %v822 = vtanh.pop %v821
    %824 = vrot.lane.b32.xlu0 %v822, 32
    %v825 = vpop.permute.xlu0 %824
    %v827 = vmul.f32 %v809, %v825
    %v828 = vpack.c.bf16 %v827, %v827
    %v830 = vshrl.u32 %v828, 16
    %v832 = vrot.slane %v830, 2
    %833 = vrot.lane.b32.xlu0 %v832, 64
    %v834 = vpop.permute.xlu0 %833
    %v836 = vsel %vm253, %v834, 0
    %838 = vmatprep.subr.bf16.mxu0 0
    %839 = vmatpush1.bf16.msra.mxu0 %v361
    %840 = vmatprep.subr.bf16.mxu0 0
    %841 = vmatpush1.bf16.msra.mxu0 %v362
    %842 = vmatprep.subr.bf16.mxu0 0
    %843 = vmatpush1.bf16.msra.mxu0 0
    %844 = vmatprep.subr.bf16.mxu0 0
    %845 = vmatpush1.bf16.msra.mxu0 0
    %846 = vmatprep.subr.bf16.mxu0 0
    %847 = vmatpush1.bf16.msra.mxu0 0
    %848 = vmatprep.subr.bf16.mxu0 0
    %849 = vmatpush1.bf16.msra.mxu0 0
    %850 = vmatprep.subr.bf16.mxu0 0
    %851 = vmatpush1.bf16.msra.mxu0 0
    %852 = vmatprep.subr.bf16.mxu0 0
    %853 = vmatpush1.bf16.msra.mxu0 0
    %854 = vmatprep.subr.bf16.mxu0 0
    %855 = vmatpush1.bf16.msra.mxu0 0
    %856 = vmatprep.subr.bf16.mxu0 0
    %857 = vmatpush1.bf16.msra.mxu0 0
    %858 = vmatprep.subr.bf16.mxu0 0
    %859 = vmatpush1.bf16.msra.mxu0 0
    %860 = vmatprep.subr.bf16.mxu0 0
    %861 = vmatpush1.bf16.msra.mxu0 0
    %862 = vmatprep.subr.bf16.mxu0 0
    %863 = vmatpush1.bf16.msra.mxu0 0
    %864 = vmatprep.subr.bf16.mxu0 0
    %865 = vmatpush1.bf16.msra.mxu0 0
    %866 = vmatprep.subr.bf16.mxu0 0
    %867 = vmatpush1.bf16.msra.mxu0 0
    %868 = vmatprep.subr.bf16.mxu0 0
    %869 = vmatpush1.bf16.msra.mxu0 0
    %870 = vmatprep.mubr.bf16.mxu0 0
    %871 = vmatmul.mubr.bf16.gmra.mrb[0].mxu0 %v836
    %v872 = vpop.f32.mrb[0].mxu0
    %v873 = vadd.f32 %v304, %v872
    %v874 = vpop.f32.mrb[0].mxu0
    %v875 = vpop.f32.mrb[0].mxu0
    %v876 = vpop.f32.mrb[0].mxu0
    %877 = vdwg.mxu0
    %v879 = vrot.slane %v873, 2
    %v881 = vsel %vm298, %v299, %v879
    %v882 = vadd.f32 %v881, %v410
    %v883 = vxor.u32 %v882, 2147483648
    %v884 = vmul.f32 %v883, 1.442695
    %v885 = vpow.pop %v884
    %v886 = vadd.f32 %v885, 1.0
    %v887 = vrcp.pop %v886
    %v888 = vmul.f32 1.0, %v887
    %v889 = vtanh.pop %v882
    %v890 = vmul.f32 %v888, %v422
    %892 = vrot.lane.b32.xlu0 %v889, 32
    %v893 = vpop.permute.xlu0 %892
    %v895 = vmul.f32 %v888, %v893
    %897 = vrot.lane.b32.xlu0 %v895, 32
    %v898 = vpop.permute.xlu0 %897
    %v900 = vadd.f32 %v890, %v898
    %v901 = vtanh.pop %v900
    %903 = vrot.lane.b32.xlu0 %v901, 32
    %v904 = vpop.permute.xlu0 %903
    %v906 = vmul.f32 %v888, %v904
    %v908 = vrot.slane %v440, 7
    %v911 = vrot.slane %v516, 7
    %v914 = vrot.slane %v594, 7
    %v917 = vrot.slane %v671, 7
    %v920 = vrot.slane %v750, 7
    %v923 = vrot.slane %v827, 7
    %v926 = vrot.slane %v906, 7
    %vm928 = vcmask 1040384
    %v929 = vsel %vm928, %v348, %v908
    %vm930 = vcmask 1041408
    %v931 = vsel %vm930, %v929, %v911
    %vm932 = vcmask 1042432
    %v933 = vsel %vm932, %v931, %v914
    %vm934 = vcmask 1043456
    %v935 = vsel %vm934, %v933, %v917
    %vm936 = vcmask 1044480
    %v937 = vsel %vm936, %v935, %v920
    %vm938 = vcmask 1045504
    %v939 = vsel %vm938, %v937, %v923
    %vm940 = vcmask 1046528
    %v941 = vsel %vm940, %v939, %v926
    %v942 = vpack.c.bf16 %v941, %v941
    %v943 = vld [vmem:[%s12] sm:$0xf]
    %v944 = vld [vmem:[%s12 + $0x4] sm:$0xf]
    %v945 = vld [vmem:[%s12 + $0x8] sm:$0xf]
    %v946 = vld [vmem:[%s12 + $0xc] sm:$0xf]
    %v947 = vld [vmem:[%s13] sm:$0x1]
    %v949 = vlaneseq
    %v950 = vshrl.u32 %v949, 7
    %v951 = vsub.s32 0, %v950
    %v952 = vrot.slane %v947, %v951
    %955 = vrot.lane.b32.xlu0 %v942, 64
    %v956 = vpop.permute.xlu0 %955
    %v961 = vunpack.c.l.b16 %v943
    %v962 = vunpack.c.l.b16 %v944
    %v963 = vunpack.c.l.b16 %v945
    %v964 = vunpack.c.l.b16 %v946
    %v965 = vpack.c.b16 %v962, %v961
    %v966 = vpack.c.b16 %v964, %v963
    %v970 = vsel %vm253, %v956, 0
    %972 = vmatprep.subr.bf16.mxu0 0
    %973 = vmatpush1.bf16.msra.mxu0 %v965
    %974 = vmatprep.subr.bf16.mxu0 0
    %975 = vmatpush1.bf16.msra.mxu0 %v966
    %976 = vmatprep.subr.bf16.mxu0 0
    %977 = vmatpush1.bf16.msra.mxu0 0
    %978 = vmatprep.subr.bf16.mxu0 0
    %979 = vmatpush1.bf16.msra.mxu0 0
    %980 = vmatprep.subr.bf16.mxu0 0
    %981 = vmatpush1.bf16.msra.mxu0 0
    %982 = vmatprep.subr.bf16.mxu0 0
    %983 = vmatpush1.bf16.msra.mxu0 0
    %984 = vmatprep.subr.bf16.mxu0 0
    %985 = vmatpush1.bf16.msra.mxu0 0
    %986 = vmatprep.subr.bf16.mxu0 0
    %987 = vmatpush1.bf16.msra.mxu0 0
    %988 = vmatprep.subr.bf16.mxu0 0
    %989 = vmatpush1.bf16.msra.mxu0 0
    %990 = vmatprep.subr.bf16.mxu0 0
    %991 = vmatpush1.bf16.msra.mxu0 0
    %992 = vmatprep.subr.bf16.mxu0 0
    %993 = vmatpush1.bf16.msra.mxu0 0
    %994 = vmatprep.subr.bf16.mxu0 0
    %995 = vmatpush1.bf16.msra.mxu0 0
    %996 = vmatprep.subr.bf16.mxu0 0
    %997 = vmatpush1.bf16.msra.mxu0 0
    %998 = vmatprep.subr.bf16.mxu0 0
    %999 = vmatpush1.bf16.msra.mxu0 0
    %1000 = vmatprep.subr.bf16.mxu0 0
    %1001 = vmatpush1.bf16.msra.mxu0 0
    %1002 = vmatprep.subr.bf16.mxu0 0
    %1003 = vmatpush1.bf16.msra.mxu0 0
    %1004 = vmatprep.mubr.bf16.mxu0 0
    %1005 = vmatmul.mubr.bf16.gmra.mrb[0].mxu0 %v970
    %v1006 = vpop.f32.mrb[0].mxu0
    %v1007 = vadd.f32 %v952, %v1006
    %v1008 = vpop.f32.mrb[0].mxu0
    %v1009 = vpop.f32.mrb[0].mxu0
    %v1010 = vpop.f32.mrb[0].mxu0
    %1011 = vdwg.mxu0
    %1012 = vst.msk [vmem:[#allocation11] sm:$0xff] %vm128, %v1007
    // Predicated region
    $region78: #{tpu_custom_call.1} parent=1 // pred_check
      _
    $region79: #{tpu_custom_call.1} parent=1 // pred_check_branch
      %1014 = sbr.rel (0) target = $region81
    $region80: #{tpu_custom_call.1} parent=1 // pred_region
      %s1016 = ssub.s32 128, 128
      %1017 = vsyncadd [#allocation4], %s1016
      %s1019 = sshll.u32 [#allocation11], 4
      %s1020 = int_to_ptr.vmem [resolvable:$true] %s1019
      %1022 = dma.vmem_to_hbm [thread:$0]  %s1020, 128, %s14, [#allocation4]
    $region81: #{tpu_custom_call.1} parent=1 // pred_fallthru
      _
    // Predicated region
    $region82: #{tpu_custom_call.1} parent=1 // pred_check
      _
    $region83: #{tpu_custom_call.1} parent=1 // pred_check_branch
      %1024 = sbr.rel (0) target = $region85
    $region84: #{tpu_custom_call.1} parent=1 // pred_region
      %1025 = dma.done [#allocation4], 128
    $region85: #{tpu_custom_call.1} parent=1 // pred_fallthru
      _
    %1026 = vsyncpa [#allocation3], 1
    %1027 = vsyncpa [#allocation6], 1
    %1028 = vsyncpa [#allocation9], 1
    %1029 = vsyncpa [#allocation4], 1

</llo_original>
